<compile_context>
chip_gen: v6e
topology: v6e:2x2x1
jax: 0.10.0
libtpu: 0.0.40
codegen_flags: <defaults>
</compile_context>

<pallas_src>
import jax
import jax.numpy as jnp
from jax.experimental import pallas as pl
from jax.experimental.pallas import tpu as pltpu

LANES = 128
DEFAULT_BLOCK_BYTES = 2 * 1024 * 1024  # ~2 MiB per block: safe on v5e/v6e/v7x


def _sign_sqrt_kernel(x_ref, o_ref):
    # Compute in float32 regardless of input dtype (bf16-safe, v5e-safe).
    x = x_ref[...].astype(jnp.float32)
    s = jnp.sqrt(1.0 + x * x)
    # y = x - sign(x) * (sqrt(1 + x^2) - 1)  ==  x - x*|x| / (sqrt(1+x^2) + 1)
    y = x - (x * jnp.abs(x)) * pl.reciprocal(s + 1.0, approx=False)
    o_ref[...] = y.astype(o_ref.dtype)


def _sign_sqrt_2d(x2d, *, block_bytes=DEFAULT_BLOCK_BYTES):
    """Run the kernel on a (rows, 128) lane-dense slab."""
    rows, lanes = x2d.shape
    itemsize = jnp.dtype(x2d.dtype).itemsize
    # Sublane packing unit: 8 rows for 32-bit, 16 for bf16, 32 for 8-bit.
    row_unit = 8 if itemsize >= 4 else (32 // itemsize)

    # Biggest row-tile within the block budget, rounded to the packing unit.
    tr = max(block_bytes // (lanes * itemsize), row_unit)
    tr = (tr // row_unit) * row_unit
    if tr >= rows:
        # Single block covering the whole array (full-dim block is always legal,
        # even when `rows` is not a multiple of the packing unit).
        tr = rows
        grid = (1,)
    else:
        # Ragged last block is masked by Pallas; no divisibility requirement.
        grid = (pl.cdiv(rows, tr),)

    n_elem = rows * lanes
    cost = pl.CostEstimate(
        flops=5 * n_elem,
        transcendentals=2 * n_elem,          # sqrt + reciprocal
        bytes_accessed=2 * n_elem * itemsize,  # one read + one write
    )

    return pl.pallas_call(
        _sign_sqrt_kernel,
        out_shape=jax.ShapeDtypeStruct((rows, lanes), x2d.dtype),
        grid_spec=pltpu.PrefetchScalarGridSpec(
            num_scalar_prefetch=0,
            grid=grid,
            in_specs=[pl.BlockSpec((tr, lanes), lambda i: (i, 0))],
            out_specs=pl.BlockSpec((tr, lanes), lambda i: (i, 0)),
        ),
        compiler_params=pltpu.CompilerParams(
            dimension_semantics=("parallel",),
        ),
        cost_estimate=cost,
    )(x2d)


def sign_sqrt(x, *, block_bytes=DEFAULT_BLOCK_BYTES):
    """Elementwise SignSqrt: x - sign(x) * (sqrt(1 + x^2) - 1)."""
    orig_shape = x.shape
    flat = x.reshape(-1)
    n = flat.shape[0]
    if n == 0:
        return x

    rem = n % LANES
    n_bulk = n - rem

    parts = []
    if n_bulk:
        out2d = _sign_sqrt_2d(
            flat[:n_bulk].reshape(n_bulk // LANES, LANES),
            block_bytes=block_bytes,
        )
        parts.append(out2d.reshape(-1))
    if rem:
        # <=127-element ragged tail: handled with plain jnp instead of padding
        # the whole array (avoids an extra full HBM pass in the aligned case).
        tail = flat[n_bulk:].astype(jnp.float32)
        s = jnp.sqrt(1.0 + tail * tail)
        y_tail = (tail - (tail * jnp.abs(tail)) / (s + 1.0)).astype(x.dtype)
        parts.append(y_tail)

    out = parts[0] if len(parts) == 1 else jnp.concatenate(parts)
    return out.reshape(orig_shape)


def sign_sqrt_ref(x):
    return x - jnp.sign(x) * (jnp.sqrt(1.0 + x * x) - 1.0)


if __name__ == "__main__":
    key = jax.random.PRNGKey(0)
    x = jax.random.normal(key, (2, 4, 16, 16), dtype=jnp.float32) * 3.0

    y = sign_sqrt(x)
    jax.block_until_ready(y)

    y_ref = sign_sqrt_ref(x)
    assert y.shape == x.shape and y.dtype == x.dtype
    assert jnp.allclose(y, y_ref, atol=1e-5, rtol=1e-5)

    # Also exercise the non-lane-divisible (ragged tail) path.
    x2 = jax.random.normal(jax.random.PRNGKey(1), (3, 5, 7, 11), dtype=jnp.float32) * 3.0
    y2 = sign_sqrt(x2)
    jax.block_until_ready(y2)
    assert y2.shape == x2.shape and y2.dtype == x2.dtype
    assert jnp.allclose(y2, sign_sqrt_ref(x2), atol=1e-5, rtol=1e-5)

    print("KERNEL_OK")
</pallas_src>

<mosaic_0001>
module attributes {stable_mosaic.version = 11 : i64} {
  func.func @_sign_sqrt_kernel(%arg0: i32, %arg1: memref<16x128xf32, #tpu.memory_space<vmem>>, %arg2: memref<16x128xf32, #tpu.memory_space<vmem>>) attributes {dimension_semantics = [#tpu.dimension_semantics<parallel>], iteration_bounds = array<i64: 1>, scalar_prefetch = 0 : i64, scratch_operands = 0 : i64, tpu.core_type = #tpu.core_type<tc>, window_params = [{transform_indices = @transform_0, window_bounds = array<i64: 16, 128>}, {transform_indices = @transform_1, window_bounds = array<i64: 16, 128>}]} {
    %c0 = arith.constant 0 : index
    %c0_0 = arith.constant 0 : index
    %0 = vector.load %arg1[%c0, %c0_0] : memref<16x128xf32, #tpu.memory_space<vmem>>, vector<16x128xf32>
    %1 = arith.mulf %0, %0 : vector<16x128xf32>
    %cst = arith.constant 1.000000e+00 : f32
    %2 = vector.broadcast %cst : f32 to vector<16x128xf32>
    %3 = arith.addf %2, %1 : vector<16x128xf32>
    %4 = math.sqrt %3 : vector<16x128xf32>
    %5 = math.absf %0 : vector<16x128xf32>
    %6 = arith.mulf %0, %5 : vector<16x128xf32>
    %cst_1 = arith.constant 1.000000e+00 : f32
    %7 = vector.broadcast %cst_1 : f32 to vector<16x128xf32>
    %8 = arith.addf %4, %7 : vector<16x128xf32>
    %9 = tpu.reciprocal %8 : vector<16x128xf32> -> vector<16x128xf32>
    %10 = arith.mulf %6, %9 : vector<16x128xf32>
    %11 = arith.subf %0, %10 : vector<16x128xf32>
    %c0_2 = arith.constant 0 : index
    %c0_3 = arith.constant 0 : index
    %12 = vector.load %arg2[%c0_2, %c0_3] : memref<16x128xf32, #tpu.memory_space<vmem>>, vector<16x128xf32>
    tpu.vector_store %arg2[%c0_2, %c0_3], %11 {strides = array<i32>} : memref<16x128xf32, #tpu.memory_space<vmem>>, vector<16x128xf32>,
    return
  }
  func.func @transform_0(%arg0: i32) -> (i32, i32) {
    %c0_i32 = arith.constant 0 : i32
    %c0_i32_0 = arith.constant 0 : i32
    return %arg0, %c0_i32 : i32, i32
  }
  func.func @transform_1(%arg0: i32) -> (i32, i32) {
    %c0_i32 = arith.constant 0 : i32
    %c0_i32_0 = arith.constant 0 : i32
    return %arg0, %c0_i32 : i32, i32
  }
}

</mosaic_0001>

<llo_original>
// kernel: tpu_custom_call.1
$region0: #{tpu_custom_call.1}
  #allocation0 [shape = 'u32[]', space=smem, size = 0x4, offset = 0x4, fixed_abs, tag = 'smem constant byte address 0x4 - core index']
  #allocation1 [shape = 'u32[144,128]{1,0:T(1,128)}', space=vmem, size = 0x12000, scoped, tag = 'internal scratch']
  %s0 = inlined_call_operand.hbm [shape: f32[16,128], index: 0, kind: input, shape index: {}]
  %s1 = inlined_call_operand.hbm [shape: f32[16,128], index: 1, kind: output, shape index: {}]
  %s2 = sld [smem:[#allocation0]]
  $region18: #{tpu_custom_call.1} parent=0
    _
  %s4 = ssub.s32 1, %s2
  %s5 = scalar_select 0, %s4, %s2
  $region1: #{tpu_custom_call.1} parent=0
    #allocation2 [shape = 'u8[8192]{0}', space=vmem, size = 0x2000, scoped, tag = 'input window, operand 0, single buffered']
    #allocation3 [shape = 's32[1]{0}', space=sflag, size = 0x4, scoped, tag = 'scoped memory for tpu_custom_call.1']
    #allocation4 [shape = 's32[1]{0}', space=sflag, size = 0x4, scoped, tag = 'scoped memory for tpu_custom_call.1']
    #allocation5 [shape = 'u8[8192]{0}', space=vmem, size = 0x2000, scoped, tag = 'output window, operand 0, single buffered']
    %6 = vsyncpa [#allocation3], 0
    %7 = vsyncpa [#allocation4], 0
    // Predicated region
    $region2: #{tpu_custom_call.1} parent=1 // pred_check
      _
    $region3: #{tpu_custom_call.1} parent=1 // pred_check_branch
      %9 = sbr.rel (0) target = $region5
    $region4: #{tpu_custom_call.1} parent=1 // pred_region
      %s11 = ssub.s32 256, 256
      %12 = vsyncadd [#allocation3], %s11
      %s13 = sshll.u32 [#allocation2], 4
      %s14 = int_to_ptr.vmem [resolvable:$true] %s13
      %19 = dma.hbm_to_vmem [thread:$0]  %s0, 256, %s14, [#allocation3], 128, 128, 8
    $region5: #{tpu_custom_call.1} parent=1 // pred_fallthru
      _
    // Predicated region
    $region6: #{tpu_custom_call.1} parent=1 // pred_check
      _
    $region7: #{tpu_custom_call.1} parent=1 // pred_check_branch
      %21 = sbr.rel (0) target = $region9
    $region8: #{tpu_custom_call.1} parent=1 // pred_region
      %22 = dma.done [#allocation3], 256
    $region9: #{tpu_custom_call.1} parent=1 // pred_fallthru
      _
    %v23 = vld [vmem:[#allocation2] sm:$0xff]
    %v24 = vld [vmem:[#allocation2 + $0x8] sm:$0xff]
    %v25 = vmul.f32 %v23, %v23
    %v26 = vmul.f32 %v24, %v24
    %v27 = vadd.f32 %v25, 1.0
    %v28 = vadd.f32 %v26, 1.0
    %v29 = vrsqrt.pop %v27
    %v30 = vmul.f32 %v27, %v29
    %vm31 = vcmp.eq.f32.partialorder %v27, inf
    %v32 = vsel %vm31, %v27, %v30
    %vm33 = vcmp.eq.f32.partialorder %v27, 0.0
    %v34 = vand.u32 %v27, 2147483648
    %v35 = vsel %vm33, %v34, %v32
    %v36 = vrsqrt.pop %v28
    %v37 = vmul.f32 %v28, %v36
    %vm38 = vcmp.eq.f32.partialorder %v28, inf
    %v39 = vsel %vm38, %v28, %v37
    %vm40 = vcmp.eq.f32.partialorder %v28, 0.0
    %v41 = vand.u32 %v28, 2147483648
    %v42 = vsel %vm40, %v41, %v39
    %v43 = vand.u32 2147483647, %v23
    %v44 = vand.u32 2147483647, %v24
    %v45 = vmul.f32 %v23, %v43
    %v46 = vmul.f32 %v24, %v44
    %v47 = vadd.f32 %v35, 1.0
    %v48 = vadd.f32 %v42, 1.0
    %v49 = vrcp.pop %v47
    %v50 = vrcp.pop %v48
    %v51 = vmul.f32 %v45, %v49
    %v52 = vmul.f32 %v46, %v50
    %v53 = vsub.f32 %v23, %v51
    %v54 = vsub.f32 %v24, %v52
    %55 = vst [vmem:[#allocation5] sm:$0xff] %v53
    %56 = vst [vmem:[#allocation5 + $0x8] sm:$0xff] %v54
    // Predicated region
    $region10: #{tpu_custom_call.1} parent=1 // pred_check
      _
    $region11: #{tpu_custom_call.1} parent=1 // pred_check_branch
      %58 = sbr.rel (0) target = $region13
    $region12: #{tpu_custom_call.1} parent=1 // pred_region
      %s60 = ssub.s32 256, 256
      %61 = vsyncadd [#allocation4], %s60
      %s62 = sshll.u32 [#allocation5], 4
      %s63 = int_to_ptr.vmem [resolvable:$true] %s62
      %68 = dma.vmem_to_hbm [thread:$0]  %s63, 256, %s1, [#allocation4], 128, 128, 8
    $region13: #{tpu_custom_call.1} parent=1 // pred_fallthru
      _
    // Predicated region
    $region14: #{tpu_custom_call.1} parent=1 // pred_check
      _
    $region15: #{tpu_custom_call.1} parent=1 // pred_check_branch
      %70 = sbr.rel (0) target = $region17
    $region16: #{tpu_custom_call.1} parent=1 // pred_region
      %71 = dma.done [#allocation4], 256
    $region17: #{tpu_custom_call.1} parent=1 // pred_fallthru
      _
    %72 = vsyncpa [#allocation3], 1
    %73 = vsyncpa [#allocation4], 1

</llo_original>
